<compile_context>
chip_gen: v7x
topology: tpu7x:2x2x1
jax: 0.10.0
libtpu: 0.0.40
codegen_flags: <defaults>
</compile_context>

<pallas_src>
import functools
import math

import jax
import jax.numpy as jnp
from jax import lax
from jax.experimental import pallas as pl
from jax.experimental.pallas import tpu as pltpu


def _round_up(x, m):
    return -(-x // m) * m


def _vmem_capacity_bytes():
    """Per-core VMEM capacity; conservative fallback if the query is unavailable."""
    try:
        return int(pltpu.get_tpu_info().vmem_capacity_bytes)
    except Exception:  # pragma: no cover - defensive
        return 64 << 20  # v7x per-core VMEM (smallest current generation)


def _sublane_granule(dtype):
    """Output-row granularity so (T, D) blocks stay sublane-packed for the dtype."""
    itemsize = jnp.dtype(dtype).itemsize
    return max(8, 32 // itemsize)  # f32 -> 8, bf16 -> 16, int8/fp8 -> 32


# --------------------------------------------------------------------------- #
# Path 1: VMEM-resident table, one-hot x table MXU gather.
# --------------------------------------------------------------------------- #
def _embedding_resident_kernel(ids_ref, table_ref, out_ref, acc_ref, *,
                               v_chunk, precision):
    """ids_ref:   VMEM (T, 1) int32 (clamped token ids for this step)
       table_ref: VMEM (V, D)       (full table, constant index_map -> resident)
       out_ref:   VMEM (T, D)
       acc_ref:   VMEM (T, D) f32 scratch accumulator
    """
    vocab = table_ref.shape[0]
    t_per = out_ref.shape[0]
    ids = ids_ref[...]  # (T, 1) int32

    acc_ref[...] = jnp.zeros_like(acc_ref)

    nc_full = vocab // v_chunk
    rem = vocab - nc_full * v_chunk

    def accumulate(start, size):
        rows = table_ref[pl.ds(start, size), :]                       # (size, D)
        col = lax.broadcasted_iota(jnp.int32, (t_per, size), 1)
        onehot = (col == (ids - start)).astype(table_ref.dtype)       # (T, size)
        acc_ref[...] += jnp.dot(onehot, rows,
                                preferred_element_type=jnp.float32,
                                precision=precision)

    if nc_full > 0:
        def chunk_body(c, carry):
            start = pl.multiple_of(c * v_chunk, v_chunk)
            accumulate(start, v_chunk)
            return carry
        lax.fori_loop(0, nc_full, chunk_body, 0)

    if rem > 0:  # static tail when V is not a multiple of v_chunk
        accumulate(nc_full * v_chunk, rem)

    out_ref[...] = acc_ref[...].astype(out_ref.dtype)


# --------------------------------------------------------------------------- #
# Path 2: table in HBM, T concurrent row DMAs + 2-slot cross-step prefetch.
# --------------------------------------------------------------------------- #
def _embedding_hbm_gather_kernel(ids_ref, table_hbm, out_ref, buf_ref, sems):
    """ids_ref:   SMEM (N_pad,) int32 (scalar-prefetched, clamped ids)
       table_hbm: HBM  (V, D)         (memory_space=pl.ANY)
       out_ref:   VMEM (T, D)
       buf_ref:   VMEM (2*T, D)       (two prefetch slots)
       sems:      DMA semaphores, shape (2,)  (one shared sem per slot)
    """
    step = pl.program_id(0)
    n_steps = pl.num_programs(0)
    t_per = out_ref.shape[0]

    def start_gather(target_step, slot):
        id_base = target_step * t_per
        row_base = slot * t_per

        def body(t, carry):
            tok = ids_ref[id_base + t]
            pltpu.make_async_copy(
                table_hbm.at[pl.ds(tok, 1), :],
                buf_ref.at[pl.ds(row_base + t, 1), :],
                sems.at[slot],
            ).start()
            return carry

        lax.fori_loop(0, t_per, body, 0, unroll=8)

    def wait_gather(slot):
        row_base = slot * t_per

        def body(t, carry):
            # Reconstructed descriptor: one row's worth per wait; T waits drain
            # the slot's shared semaphore exactly.
            pltpu.make_async_copy(
                table_hbm.at[pl.ds(0, 1), :],
                buf_ref.at[pl.ds(row_base + t, 1), :],
                sems.at[slot],
            ).wait()
            return carry

        lax.fori_loop(0, t_per, body, 0, unroll=8)

    slot = step % 2

    @pl.when(step == 0)
    def _():                      # prime the pipeline
        start_gather(0, 0)

    @pl.when(step + 1 < n_steps)
    def _():                      # prefetch next step into the other slot
        start_gather(step + 1, 1 - slot)

    wait_gather(slot)
    row0 = pl.multiple_of(slot * t_per, t_per)
    out_ref[...] = buf_ref[pl.ds(row0, t_per), :]   # dense (T, D) copy-out


# --------------------------------------------------------------------------- #
# Wrapper (nn.Embedding(weight=table)(input_ids))
# --------------------------------------------------------------------------- #
def word_embedding_forward(input_ids, table, *, tokens_per_step=None,
                           v_chunk=256, force_hbm_gather=False):
    """Equivalent of nn.Embedding forward: returns table[input_ids, :].

    input_ids: integer array of any shape (e.g. (B, S))
    table:     (V, D) embedding table
    returns:   (*input_ids.shape, D), dtype of `table`
    """
    V, D = table.shape
    dtype = table.dtype
    itemsize = jnp.dtype(dtype).itemsize

    orig_shape = tuple(input_ids.shape)
    n_tokens = math.prod(orig_shape) if orig_shape else 1

    # Tokens per grid step: auto-scale with the token count (cap 256), rounded
    # to the dtype's sublane granularity so output tiles stay dense.
    granule = _sublane_granule(dtype)
    if tokens_per_step is None:
        t_per = min(256, _round_up(n_tokens, granule))
    else:
        t_per = _round_up(max(int(tokens_per_step), granule), granule)

    # Bounds safety: clamp ids into [0, V).  (PyTorch raises on OOB ids; we
    # clamp instead -- documented semantic difference.)
    flat_ids = jnp.clip(input_ids.reshape(-1).astype(jnp.int32), 0, V - 1)

    # Pad token count to a multiple of t_per (pad rows gather row 0, sliced off).
    n_pad = _round_up(n_tokens, t_per)
    if n_pad != n_tokens:
        flat_ids = jnp.concatenate(
            [flat_ids, jnp.zeros((n_pad - n_tokens,), jnp.int32)])
    grid = (n_pad // t_per,)

    table_bytes = V * D * itemsize
    out_block_bytes = t_per * D * itemsize
    acc_bytes = t_per * D * 4

    # Generation-aware resident budget: assume the constant table block is
    # double-buffered plus the double-buffered output block, the f32
    # accumulator and slack for the one-hot intermediates.
    resident_need = 2 * table_bytes + 2 * out_block_bytes + acc_bytes + (8 << 20)
    vmem_cap = _vmem_capacity_bytes()
    use_resident = (not force_hbm_gather) and resident_need <= int(0.85 * vmem_cap)

    out_shape = jax.ShapeDtypeStruct((n_pad, D), dtype)

    if use_resident:
        # f32 tables: force full-precision MXU passes so the gather is (near-)
        # exact; bf16/int tables are exact with the default path.
        precision = lax.Precision.HIGHEST if dtype == jnp.float32 else None
        v_chunk_eff = max(8, _round_up(min(v_chunk, V), 8))
        kernel = functools.partial(_embedding_resident_kernel,
                                   v_chunk=v_chunk_eff, precision=precision)
        grid_spec = pltpu.PrefetchScalarGridSpec(
            num_scalar_prefetch=0,
            grid=grid,
            in_specs=[pl.BlockSpec((t_per, 1), lambda i: (i, 0)),   # ids (VMEM)
                      pl.BlockSpec((V, D), lambda i: (0, 0))],      # resident table
            out_specs=pl.BlockSpec((t_per, D), lambda i: (i, 0)),
            scratch_shapes=[pltpu.VMEM((t_per, D), jnp.float32)],
        )
        out_flat = pl.pallas_call(
            kernel,
            out_shape=out_shape,
            grid_spec=grid_spec,
            compiler_params=pltpu.CompilerParams(
                dimension_semantics=("parallel",),
                vmem_limit_bytes=int(resident_need),
            ),
        )(flat_ids.reshape(n_pad, 1), table)
    else:
        # NOTE: scalar-prefetched ids live in SMEM; practical ceiling is a few
        # hundred K tokens per call on this path.
        hbm_vmem_limit = int(4 * out_block_bytes + (4 << 20))
        grid_spec = pltpu.PrefetchScalarGridSpec(
            num_scalar_prefetch=1,
            grid=grid,
            in_specs=[pl.BlockSpec(memory_space=pl.ANY)],           # table in HBM
            out_specs=pl.BlockSpec((t_per, D), lambda i, ids: (i, 0)),
            scratch_shapes=[pltpu.VMEM((2 * t_per, D), dtype),      # 2 prefetch slots
                            pltpu.SemaphoreType.DMA((2,))],
        )
        out_flat = pl.pallas_call(
            _embedding_hbm_gather_kernel,
            out_shape=out_shape,
            grid_spec=grid_spec,
            compiler_params=pltpu.CompilerParams(
                dimension_semantics=("arbitrary",),  # cross-step prefetch carry
                vmem_limit_bytes=hbm_vmem_limit,
            ),
        )(flat_ids, table)

    return out_flat[:n_tokens].reshape(*orig_shape, D)


if __name__ == "__main__":
    key = jax.random.PRNGKey(0)
    k_table, k_ids, k_table2, k_ids2 = jax.random.split(key, 4)

    # Small, TPU-friendly shapes: vocab=64, embed_dim=128, batch=2, seq=8.
    V, D = 64, 128
    B, S = 2, 8
    embedding_table = jax.random.normal(k_table, (V, D), dtype=jnp.float32)
    input_ids = jax.random.randint(k_ids, (B, S), 0, V, dtype=jnp.int32)

    # Reference: plain JAX gather (same semantics as nn.Embedding forward).
    ref = jnp.take(embedding_table, input_ids, axis=0)

    # Fast path: VMEM-resident table (single-chunk one-hot MXU gather).
    out_resident = jax.block_until_ready(
        word_embedding_forward(input_ids, embedding_table))
    assert out_resident.shape == (B, S, D)
    assert jnp.allclose(out_resident, ref, rtol=1e-5, atol=1e-5), \
        "resident-table path mismatch"

    # Resident path with V > v_chunk: exercises the chunk fori_loop + tail.
    V2 = 272
    table2 = jax.random.normal(k_table2, (V2, D), dtype=jnp.float32)
    ids2 = jax.random.randint(k_ids2, (3, 17), 0, V2, dtype=jnp.int32)
    ref2 = jnp.take(table2, ids2, axis=0)
    out2 = jax.block_until_ready(word_embedding_forward(ids2, table2))
    assert out2.shape == (3, 17, D)
    assert jnp.allclose(out2, ref2, rtol=1e-5, atol=1e-5), \
        "chunked resident path mismatch"

    # Fallback path: HBM row-gather DMAs with 2-slot prefetch (forced here).
    out_hbm = jax.block_until_ready(
        word_embedding_forward(input_ids, embedding_table,
                               force_hbm_gather=True))
    assert jnp.array_equal(out_hbm, ref), "HBM-gather path mismatch"

    # TODO(synk): PyTorch raises on out-of-range ids; this kernel clamps them.
    print("KERNEL_OK")
</pallas_src>

<mosaic_0001>
module attributes {stable_mosaic.version = 11 : i64} {
  func.func @_embedding_resident_kernel(%arg0: i32, %arg1: memref<16x1xi32, #tpu.memory_space<vmem>>, %arg2: memref<64x128xf32, #tpu.memory_space<vmem>>, %arg3: memref<16x128xf32, #tpu.memory_space<vmem>>, %arg4: memref<16x128xf32, #tpu.memory_space<vmem>>) attributes {dimension_semantics = [#tpu.dimension_semantics<parallel>], iteration_bounds = array<i64: 1>, scalar_prefetch = 0 : i64, scratch_operands = 1 : i64, tpu.core_type = #tpu.core_type<tc>, window_params = [{transform_indices = @transform_0, window_bounds = array<i64: 16, 1>}, {pipeline_mode = #tpu.pipeline_mode<synchronous>, transform_indices = @transform_1, window_bounds = array<i64: 64, 128>}, {transform_indices = @transform_2, window_bounds = array<i64: 16, 128>}]} {
    %c0 = arith.constant 0 : index
    %c0_0 = arith.constant 0 : index
    %0 = vector.load %arg1[%c0, %c0_0] : memref<16x1xi32, #tpu.memory_space<vmem>>, vector<16x1xi32>
    %cst = arith.constant 0.000000e+00 : f32
    %1 = vector.broadcast %cst : f32 to vector<16x128xf32>
    %c0_1 = arith.constant 0 : index
    %c0_2 = arith.constant 0 : index
    %2 = vector.load %arg4[%c0_1, %c0_2] : memref<16x128xf32, #tpu.memory_space<vmem>>, vector<16x128xf32>
    tpu.vector_store %arg4[%c0_1, %c0_2], %1 {strides = array<i32>} : memref<16x128xf32, #tpu.memory_space<vmem>>, vector<16x128xf32>,
    %c0_i32 = arith.constant 0 : i32
    %c64_i32 = arith.constant 64 : i32
    %3 = arith.muli %c0_i32, %c64_i32 : i32
    %4 = tpu.assume_multiple %3, 64 : i32
    %5 = arith.index_cast %4 : i32 to index
    %c0_3 = arith.constant 0 : index
    %6 = vector.load %arg2[%5, %c0_3] : memref<64x128xf32, #tpu.memory_space<vmem>>, vector<64x128xf32>
    %7 = tpu.iota {dimensions = array<i32: 1>} : vector<16x64xi32>
    %8 = vector.broadcast %4 : i32 to vector<16x1xi32>
    %9 = arith.subi %0, %8 : vector<16x1xi32>
    %10 = vector.broadcast %9 : vector<16x1xi32> to vector<16x64xi32>
    %11 = arith.cmpi eq, %7, %10 : vector<16x64xi32>
    %12 = arith.extui %11 : vector<16x64xi1> to vector<16x64xi32>
    %13 = arith.sitofp %12 : vector<16x64xi32> to vector<16x64xf32>
    %c0_4 = arith.constant 0 : index
    %c0_5 = arith.constant 0 : index
    %14 = vector.load %arg4[%c0_4, %c0_5] : memref<16x128xf32, #tpu.memory_space<vmem>>, vector<16x128xf32>
    %cst_6 = arith.constant dense<0.000000e+00> : vector<16x128xf32>
    %15 = tpu.matmul %13, %6, %cst_6 {dimension_numbers = #tpu.dot_dimension_numbers<[1], [0], [0], [1], [0, 0, 1, 1], [], []>, precision = #tpu.contract_precision<fp32>} : vector<16x64xf32>, vector<64x128xf32>, vector<16x128xf32> -> vector<16x128xf32>
    %16 = arith.addf %14, %15 : vector<16x128xf32>
    %c0_7 = arith.constant 0 : index
    %c0_8 = arith.constant 0 : index
    %17 = vector.load %arg4[%c0_7, %c0_8] : memref<16x128xf32, #tpu.memory_space<vmem>>, vector<16x128xf32>
    tpu.vector_store %arg4[%c0_7, %c0_8], %16 {strides = array<i32>} : memref<16x128xf32, #tpu.memory_space<vmem>>, vector<16x128xf32>,
    %c1_i32 = arith.constant 1 : i32
    %c0_9 = arith.constant 0 : index
    %c0_10 = arith.constant 0 : index
    %18 = vector.load %arg4[%c0_9, %c0_10] : memref<16x128xf32, #tpu.memory_space<vmem>>, vector<16x128xf32>
    %c0_11 = arith.constant 0 : index
    %c0_12 = arith.constant 0 : index
    %19 = vector.load %arg3[%c0_11, %c0_12] : memref<16x128xf32, #tpu.memory_space<vmem>>, vector<16x128xf32>
    tpu.vector_store %arg3[%c0_11, %c0_12], %18 {strides = array<i32>} : memref<16x128xf32, #tpu.memory_space<vmem>>, vector<16x128xf32>,
    return
  }
  func.func @transform_0(%arg0: i32) -> (i32, i32) {
    %c0_i32 = arith.constant 0 : i32
    %c0_i32_0 = arith.constant 0 : i32
    return %arg0, %c0_i32 : i32, i32
  }
  func.func @transform_1(%arg0: i32) -> (i32, i32) {
    %c0_i32 = arith.constant 0 : i32
    %c0_i32_0 = arith.constant 0 : i32
    %c0_i32_1 = arith.constant 0 : i32
    return %c0_i32, %c0_i32_0 : i32, i32
  }
  func.func @transform_2(%arg0: i32) -> (i32, i32) {
    %c0_i32 = arith.constant 0 : i32
    %c0_i32_0 = arith.constant 0 : i32
    return %arg0, %c0_i32 : i32, i32
  }
}

</mosaic_0001>

<llo_original>
// kernel: tpu_custom_call.1
$region0: #{tpu_custom_call.1}
  #allocation0 [shape = 'u32[]', space=smem, size = 0x4, offset = 0x4, fixed_abs, tag = 'smem constant byte address 0x4 - core index']
  #allocation1 [shape = 'u32[144,128]{1,0:T(1,128)}', space=vmem, size = 0x12000, scoped, tag = 'internal scratch']
  #allocation2 [shape = 'f32[16,128]{1,0:T(8,128)}', space=vmem, size = 0x2000, scoped, tag = 'scratch operand']
  %s0 = inlined_call_operand.vmem [shape: s32[16,1], index: 0, kind: input, shape index: {}]
  %s1 = inlined_call_operand.hbm [shape: f32[64,128], index: 1, kind: input, shape index: {}]
  %s2 = inlined_call_operand.hbm [shape: f32[16,128], index: 2, kind: output, shape index: {}]
  %s3 = sld [smem:[#allocation0]]
  $region22: #{tpu_custom_call.1} parent=0
    _
  %s5 = ssub.s32 1, %s3
  %s6 = scalar_select 0, %s5, %s3
  $region1: #{tpu_custom_call.1} parent=0
    #allocation3 [shape = 'u8[32768]{0}', space=vmem, size = 0x8000, scoped, tag = 'input window, operand 1, single buffered']
    #allocation4 [shape = 's32[1]{0}', space=sflag, size = 0x4, scoped, tag = 'scoped memory for tpu_custom_call.1']
    #allocation5 [shape = 's32[1]{0}', space=sflag, size = 0x4, scoped, tag = 'scoped memory for tpu_custom_call.1']
    #allocation6 [shape = 'u8[8192]{0}', space=vmem, size = 0x2000, scoped, tag = 'output window, operand 0, single buffered']
    %7 = vsyncpa [#allocation4], 0
    %8 = vsyncpa [#allocation5], 0
    // Predicated region
    $region2: #{tpu_custom_call.1} parent=1 // pred_check
      _
    $region3: #{tpu_custom_call.1} parent=1 // pred_check_branch
      %10 = sbr.rel (0) target = $region5
    $region4: #{tpu_custom_call.1} parent=1 // pred_region
      _
    $region5: #{tpu_custom_call.1} parent=1 // pred_fallthru
      _
    // Predicated region
    $region6: #{tpu_custom_call.1} parent=1 // pred_check
      _
    $region7: #{tpu_custom_call.1} parent=1 // pred_check_branch
      %12 = sbr.rel (0) target = $region9
    $region8: #{tpu_custom_call.1} parent=1 // pred_region
      %s14 = ssub.s32 1024, 1024
      %15 = vsyncadd [#allocation4], %s14
      %s16 = sshll.u32 [#allocation3], 4
      %s17 = int_to_ptr.vmem [resolvable:$true] %s16
      %22 = dma.hbm_to_vmem [thread:$0]  %s1, 1024, %s17, [#allocation4], 128, 128, 8
    $region9: #{tpu_custom_call.1} parent=1 // pred_fallthru
      _
    // Predicated region
    $region10: #{tpu_custom_call.1} parent=1 // pred_check
      _
    $region11: #{tpu_custom_call.1} parent=1 // pred_check_branch
      %24 = sbr.rel (0) target = $region13
    $region12: #{tpu_custom_call.1} parent=1 // pred_region
      %25 = dma.done [#allocation4], 1024
    $region13: #{tpu_custom_call.1} parent=1 // pred_fallthru
      _
    %v26 = vld [vmem:[%s0] sm:$0xff]
    %v27 = vld [vmem:[%s0 + $0x8] sm:$0xff]
    %28 = vst [vmem:[#allocation2] sm:$0xff] 0.0
    %29 = vst [vmem:[#allocation2 + $0x8] sm:$0xff] 0.0
    %v30 = vld [vmem:[#allocation3] sm:$0xff]
    %v31 = vld [vmem:[#allocation3 + $0x8] sm:$0xff]
    %v32 = vld [vmem:[#allocation3 + $0x10] sm:$0xff]
    %v33 = vld [vmem:[#allocation3 + $0x18] sm:$0xff]
    %v34 = vld [vmem:[#allocation3 + $0x20] sm:$0xff]
    %v35 = vld [vmem:[#allocation3 + $0x28] sm:$0xff]
    %v36 = vld [vmem:[#allocation3 + $0x30] sm:$0xff]
    %v37 = vld [vmem:[#allocation3 + $0x38] sm:$0xff]
    %v38 = vlaneseq
    %v39 = vand.u32 %v38, 127
    %v40 = vstv 0
    %v41 = vsub.s32 %v26, %v40
    %v42 = vsub.s32 %v27, %v40
    %43 = vset.pattern.permute.xlu0 0
    %44 = vperm.xlu0 %43, %v41
    %v45 = vpop.permute.xlu0 %44
    %46 = vset.pattern.permute.xlu0 0
    %47 = vperm.xlu0 %46, %v42
    %v48 = vpop.permute.xlu0 %47
    %vm49 = vcmp.eq.s32.totalorder %v39, %v45
    %vm50 = vcmp.eq.s32.totalorder %v39, %v48
    %v51 = vsel %vm49, 1, 0
    %v52 = vsel %vm50, 1, 0
    %v53 = vcvt.s32.f32 %v51
    %v54 = vcvt.s32.f32 %v52
    %v55 = vld [vmem:[#allocation2] sm:$0xff]
    %v56 = vld [vmem:[#allocation2 + $0x8] sm:$0xff]
    %vm57 = vcmask 523264
    %v59 = vsel %vm57, %v53, 0
    %v62 = vsel %vm57, %v54, 0
    %64 = vmatprep.subr.mxu0 0.0
    %v65 = vand.u32 %v30, 4294901760
    %66 = vmatpush1.msra.mxu0 %v65
    %67 = vmatprep.subr.mxu0 0.0
    %v68 = vand.u32 %v31, 4294901760
    %69 = vmatpush1.msra.mxu0 %v68
    %70 = vmatprep.subr.mxu0 0.0
    %v71 = vand.u32 %v32, 4294901760
    %72 = vmatpush1.msra.mxu0 %v71
    %73 = vmatprep.subr.mxu0 0.0
    %v74 = vand.u32 %v33, 4294901760
    %75 = vmatpush1.msra.mxu0 %v74
    %76 = vmatprep.subr.mxu0 0.0
    %v77 = vand.u32 %v34, 4294901760
    %78 = vmatpush1.msra.mxu0 %v77
    %79 = vmatprep.subr.mxu0 0.0
    %v80 = vand.u32 %v35, 4294901760
    %81 = vmatpush1.msra.mxu0 %v80
    %82 = vmatprep.subr.mxu0 0.0
    %v83 = vand.u32 %v36, 4294901760
    %84 = vmatpush1.msra.mxu0 %v83
    %85 = vmatprep.subr.mxu0 0.0
    %v86 = vand.u32 %v37, 4294901760
    %87 = vmatpush1.msra.mxu0 %v86
    %88 = vmatprep.subr.mxu0 0.0
    %89 = vmatpush1.msra.mxu0 0.0
    %90 = vmatprep.subr.mxu0 0.0
    %91 = vmatpush1.msra.mxu0 0.0
    %92 = vmatprep.subr.mxu0 0.0
    %93 = vmatpush1.msra.mxu0 0.0
    %94 = vmatprep.subr.mxu0 0.0
    %95 = vmatpush1.msra.mxu0 0.0
    %96 = vmatprep.subr.mxu0 0.0
    %97 = vmatpush1.msra.mxu0 0.0
    %98 = vmatprep.subr.mxu0 0.0
    %99 = vmatpush1.msra.mxu0 0.0
    %100 = vmatprep.subr.mxu0 0.0
    %101 = vmatpush1.msra.mxu0 0.0
    %102 = vmatprep.subr.mxu0 0.0
    %103 = vmatpush1.msra.mxu0 0.0
    %104 = vmatprep.subr.mxu0 0.0
    %105 = vmatpush1.msra.mxu0 0.0
    %106 = vmatprep.subr.mxu0 0.0
    %107 = vmatpush1.msra.mxu0 0.0
    %108 = vmatprep.subr.mxu0 0.0
    %109 = vmatpush1.msra.mxu0 0.0
    %110 = vmatprep.subr.mxu0 0.0
    %111 = vmatpush1.msra.mxu0 0.0
    %112 = vmatprep.subr.mxu0 0.0
    %113 = vmatpush1.msra.mxu0 0.0
    %114 = vmatprep.subr.mxu0 0.0
    %115 = vmatpush1.msra.mxu0 0.0
    %116 = vmatprep.subr.mxu0 0.0
    %117 = vmatpush1.msra.mxu0 0.0
    %118 = vmatprep.subr.mxu0 0.0
    %119 = vmatpush1.msra.mxu0 0.0
    %120 = vmatprep.subr.mxu0 0.0
    %121 = vmatpush1.msra.mxu0 0.0
    %122 = vmatprep.subr.mxu0 0.0
    %123 = vmatpush1.msra.mxu0 0.0
    %124 = vmatprep.subr.mxu0 0.0
    %125 = vmatpush1.msra.mxu0 0.0
    %126 = vmatprep.subr.mxu0 0.0
    %127 = vmatpush1.msra.mxu0 0.0
    %128 = vmatprep.subr.mxu0 0.0
    %129 = vmatpush1.msra.mxu0 0.0
    %130 = vmatprep.subr.mxu0 0.0
    %131 = vmatpush1.msra.mxu0 0.0
    %132 = vmatprep.subr.mxu0 0.0
    %133 = vmatpush1.msra.mxu0 0.0
    %134 = vmatprep.subr.mxu0 0.0
    %135 = vmatpush1.msra.mxu0 0.0
    %136 = vmatprep.mubr.f32.mxu0 0.0
    %v137 = vand.u32 %v59, 4294901760
    %v138 = vsub.f32 %v59, %v137
    %v139 = vand.u32 %v138, 4294901760
    %v140 = vsub.f32 %v138, %v139
    %v141 = vand.u32 %v140, 4294901760
    %142 = vmatmul.mubr.f32.gmra.mrb[0].mxu0 %v141
    %v143 = vpop.f32.mrb[0].mxu0
    %v144 = vadd.f32 0.0, %v143
    %v145 = vpop.f32.mrb[0].mxu0
    %146 = vmatprep.mubr.f32.mxu0 0.0
    %v147 = vand.u32 %v62, 4294901760
    %v148 = vsub.f32 %v62, %v147
    %v149 = vand.u32 %v148, 4294901760
    %v150 = vsub.f32 %v148, %v149
    %v151 = vand.u32 %v150, 4294901760
    %152 = vmatmul.mubr.f32.gmra.mrb[0].mxu0 %v151
    %v153 = vpop.f32.mrb[0].mxu0
    %v154 = vadd.f32 0.0, %v153
    %v155 = vpop.f32.mrb[0].mxu0
    %156 = vdwg.mxu0
    %157 = vmatprep.subr.mxu0 0.0
    %v158 = vand.u32 %v30, 4294901760
    %v159 = vsub.f32 %v30, %v158
    %v160 = vand.u32 %v159, 4294901760
    %v161 = vsub.f32 %v159, %v160
    %v162 = vand.u32 %v161, 4294901760
    %163 = vmatpush1.msra.mxu0 %v162
    %164 = vmatprep.subr.mxu0 0.0
    %v165 = vand.u32 %v31, 4294901760
    %v166 = vsub.f32 %v31, %v165
    %v167 = vand.u32 %v166, 4294901760
    %v168 = vsub.f32 %v166, %v167
    %v169 = vand.u32 %v168, 4294901760
    %170 = vmatpush1.msra.mxu0 %v169
    %171 = vmatprep.subr.mxu0 0.0
    %v172 = vand.u32 %v32, 4294901760
    %v173 = vsub.f32 %v32, %v172
    %v174 = vand.u32 %v173, 4294901760
    %v175 = vsub.f32 %v173, %v174
    %v176 = vand.u32 %v175, 4294901760
    %177 = vmatpush1.msra.mxu0 %v176
    %178 = vmatprep.subr.mxu0 0.0
    %v179 = vand.u32 %v33, 4294901760
    %v180 = vsub.f32 %v33, %v179
    %v181 = vand.u32 %v180, 4294901760
    %v182 = vsub.f32 %v180, %v181
    %v183 = vand.u32 %v182, 4294901760
    %184 = vmatpush1.msra.mxu0 %v183
    %185 = vmatprep.subr.mxu0 0.0
    %v186 = vand.u32 %v34, 4294901760
    %v187 = vsub.f32 %v34, %v186
    %v188 = vand.u32 %v187, 4294901760
    %v189 = vsub.f32 %v187, %v188
    %v190 = vand.u32 %v189, 4294901760
    %191 = vmatpush1.msra.mxu0 %v190
    %192 = vmatprep.subr.mxu0 0.0
    %v193 = vand.u32 %v35, 4294901760
    %v194 = vsub.f32 %v35, %v193
    %v195 = vand.u32 %v194, 4294901760
    %v196 = vsub.f32 %v194, %v195
    %v197 = vand.u32 %v196, 4294901760
    %198 = vmatpush1.msra.mxu0 %v197
    %199 = vmatprep.subr.mxu0 0.0
    %v200 = vand.u32 %v36, 4294901760
    %v201 = vsub.f32 %v36, %v200
    %v202 = vand.u32 %v201, 4294901760
    %v203 = vsub.f32 %v201, %v202
    %v204 = vand.u32 %v203, 4294901760
    %205 = vmatpush1.msra.mxu0 %v204
    %206 = vmatprep.subr.mxu0 0.0
    %v207 = vand.u32 %v37, 4294901760
    %v208 = vsub.f32 %v37, %v207
    %v209 = vand.u32 %v208, 4294901760
    %v210 = vsub.f32 %v208, %v209
    %v211 = vand.u32 %v210, 4294901760
    %212 = vmatpush1.msra.mxu0 %v211
    %213 = vmatprep.subr.mxu0 0.0
    %214 = vmatpush1.msra.mxu0 0.0
    %215 = vmatprep.subr.mxu0 0.0
    %216 = vmatpush1.msra.mxu0 0.0
    %217 = vmatprep.subr.mxu0 0.0
    %218 = vmatpush1.msra.mxu0 0.0
    %219 = vmatprep.subr.mxu0 0.0
    %220 = vmatpush1.msra.mxu0 0.0
    %221 = vmatprep.subr.mxu0 0.0
    %222 = vmatpush1.msra.mxu0 0.0
    %223 = vmatprep.subr.mxu0 0.0
    %224 = vmatpush1.msra.mxu0 0.0
    %225 = vmatprep.subr.mxu0 0.0
    %226 = vmatpush1.msra.mxu0 0.0
    %227 = vmatprep.subr.mxu0 0.0
    %228 = vmatpush1.msra.mxu0 0.0
    %229 = vmatprep.subr.mxu0 0.0
    %230 = vmatpush1.msra.mxu0 0.0
    %231 = vmatprep.subr.mxu0 0.0
    %232 = vmatpush1.msra.mxu0 0.0
    %233 = vmatprep.subr.mxu0 0.0
    %234 = vmatpush1.msra.mxu0 0.0
    %235 = vmatprep.subr.mxu0 0.0
    %236 = vmatpush1.msra.mxu0 0.0
    %237 = vmatprep.subr.mxu0 0.0
    %238 = vmatpush1.msra.mxu0 0.0
    %239 = vmatprep.subr.mxu0 0.0
    %240 = vmatpush1.msra.mxu0 0.0
    %241 = vmatprep.subr.mxu0 0.0
    %242 = vmatpush1.msra.mxu0 0.0
    %243 = vmatprep.subr.mxu0 0.0
    %244 = vmatpush1.msra.mxu0 0.0
    %245 = vmatprep.subr.mxu0 0.0
    %246 = vmatpush1.msra.mxu0 0.0
    %247 = vmatprep.subr.mxu0 0.0
    %248 = vmatpush1.msra.mxu0 0.0
    %249 = vmatprep.subr.mxu0 0.0
    %250 = vmatpush1.msra.mxu0 0.0
    %251 = vmatprep.subr.mxu0 0.0
    %252 = vmatpush1.msra.mxu0 0.0
    %253 = vmatprep.subr.mxu0 0.0
    %254 = vmatpush1.msra.mxu0 0.0
    %255 = vmatprep.subr.mxu0 0.0
    %256 = vmatpush1.msra.mxu0 0.0
    %257 = vmatprep.subr.mxu0 0.0
    %258 = vmatpush1.msra.mxu0 0.0
    %259 = vmatprep.subr.mxu0 0.0
    %260 = vmatpush1.msra.mxu0 0.0
    %261 = vmatprep.mubr.f32.mxu0 0.0
    %v262 = vand.u32 %v59, 4294901760
    %263 = vmatmul.mubr.f32.gmra.mrb[0].mxu0 %v262
    %v264 = vpop.f32.mrb[0].mxu0
    %v265 = vadd.f32 %v144, %v264
    %v266 = vpop.f32.mrb[0].mxu0
    %267 = vmatprep.mubr.f32.mxu0 0.0
    %v268 = vand.u32 %v62, 4294901760
    %269 = vmatmul.mubr.f32.gmra.mrb[0].mxu0 %v268
    %v270 = vpop.f32.mrb[0].mxu0
    %v271 = vadd.f32 %v154, %v270
    %v272 = vpop.f32.mrb[0].mxu0
    %273 = vdwg.mxu0
    %274 = vmatprep.subr.mxu0 0.0
    %v275 = vand.u32 %v30, 4294901760
    %v276 = vsub.f32 %v30, %v275
    %277 = vmatpush1.msra.mxu0 %v276
    %278 = vmatprep.subr.mxu0 0.0
    %v279 = vand.u32 %v31, 4294901760
    %v280 = vsub.f32 %v31, %v279
    %281 = vmatpush1.msra.mxu0 %v280
    %282 = vmatprep.subr.mxu0 0.0
    %v283 = vand.u32 %v32, 4294901760
    %v284 = vsub.f32 %v32, %v283
    %285 = vmatpush1.msra.mxu0 %v284
    %286 = vmatprep.subr.mxu0 0.0
    %v287 = vand.u32 %v33, 4294901760
    %v288 = vsub.f32 %v33, %v287
    %289 = vmatpush1.msra.mxu0 %v288
    %290 = vmatprep.subr.mxu0 0.0
    %v291 = vand.u32 %v34, 4294901760
    %v292 = vsub.f32 %v34, %v291
    %293 = vmatpush1.msra.mxu0 %v292
    %294 = vmatprep.subr.mxu0 0.0
    %v295 = vand.u32 %v35, 4294901760
    %v296 = vsub.f32 %v35, %v295
    %297 = vmatpush1.msra.mxu0 %v296
    %298 = vmatprep.subr.mxu0 0.0
    %v299 = vand.u32 %v36, 4294901760
    %v300 = vsub.f32 %v36, %v299
    %301 = vmatpush1.msra.mxu0 %v300
    %302 = vmatprep.subr.mxu0 0.0
    %v303 = vand.u32 %v37, 4294901760
    %v304 = vsub.f32 %v37, %v303
    %305 = vmatpush1.msra.mxu0 %v304
    %306 = vmatprep.subr.mxu0 0.0
    %307 = vmatpush1.msra.mxu0 0.0
    %308 = vmatprep.subr.mxu0 0.0
    %309 = vmatpush1.msra.mxu0 0.0
    %310 = vmatprep.subr.mxu0 0.0
    %311 = vmatpush1.msra.mxu0 0.0
    %312 = vmatprep.subr.mxu0 0.0
    %313 = vmatpush1.msra.mxu0 0.0
    %314 = vmatprep.subr.mxu0 0.0
    %315 = vmatpush1.msra.mxu0 0.0
    %316 = vmatprep.subr.mxu0 0.0
    %317 = vmatpush1.msra.mxu0 0.0
    %318 = vmatprep.subr.mxu0 0.0
    %319 = vmatpush1.msra.mxu0 0.0
    %320 = vmatprep.subr.mxu0 0.0
    %321 = vmatpush1.msra.mxu0 0.0
    %322 = vmatprep.subr.mxu0 0.0
    %323 = vmatpush1.msra.mxu0 0.0
    %324 = vmatprep.subr.mxu0 0.0
    %325 = vmatpush1.msra.mxu0 0.0
    %326 = vmatprep.subr.mxu0 0.0
    %327 = vmatpush1.msra.mxu0 0.0
    %328 = vmatprep.subr.mxu0 0.0
    %329 = vmatpush1.msra.mxu0 0.0
    %330 = vmatprep.subr.mxu0 0.0
    %331 = vmatpush1.msra.mxu0 0.0
    %332 = vmatprep.subr.mxu0 0.0
    %333 = vmatpush1.msra.mxu0 0.0
    %334 = vmatprep.subr.mxu0 0.0
    %335 = vmatpush1.msra.mxu0 0.0
    %336 = vmatprep.subr.mxu0 0.0
    %337 = vmatpush1.msra.mxu0 0.0
    %338 = vmatprep.subr.mxu0 0.0
    %339 = vmatpush1.msra.mxu0 0.0
    %340 = vmatprep.subr.mxu0 0.0
    %341 = vmatpush1.msra.mxu0 0.0
    %342 = vmatprep.subr.mxu0 0.0
    %343 = vmatpush1.msra.mxu0 0.0
    %344 = vmatprep.subr.mxu0 0.0
    %345 = vmatpush1.msra.mxu0 0.0
    %346 = vmatprep.subr.mxu0 0.0
    %347 = vmatpush1.msra.mxu0 0.0
    %348 = vmatprep.subr.mxu0 0.0
    %349 = vmatpush1.msra.mxu0 0.0
    %350 = vmatprep.subr.mxu0 0.0
    %351 = vmatpush1.msra.mxu0 0.0
    %352 = vmatprep.subr.mxu0 0.0
    %353 = vmatpush1.msra.mxu0 0.0
    %354 = vmatprep.mubr.f32.mxu0 0.0
    %v355 = vand.u32 %v59, 4294901760
    %v356 = vsub.f32 %v59, %v355
    %357 = vmatmul.mubr.f32.gmra.mrb[0].mxu0 %v356
    %v358 = vpop.f32.mrb[0].mxu0
    %v359 = vadd.f32 %v265, %v358
    %v360 = vpop.f32.mrb[0].mxu0
    %361 = vmatprep.mubr.f32.mxu0 0.0
    %v362 = vand.u32 %v62, 4294901760
    %v363 = vsub.f32 %v62, %v362
    %364 = vmatmul.mubr.f32.gmra.mrb[0].mxu0 %v363
    %v365 = vpop.f32.mrb[0].mxu0
    %v366 = vadd.f32 %v271, %v365
    %v367 = vpop.f32.mrb[0].mxu0
    %368 = vdwg.mxu0
    %369 = vmatprep.subr.mxu0 0.0
    %v370 = vand.u32 %v30, 4294901760
    %371 = vmatpush1.msra.mxu0 %v370
    %372 = vmatprep.subr.mxu0 0.0
    %v373 = vand.u32 %v31, 4294901760
    %374 = vmatpush1.msra.mxu0 %v373
    %375 = vmatprep.subr.mxu0 0.0
    %v376 = vand.u32 %v32, 4294901760
    %377 = vmatpush1.msra.mxu0 %v376
    %378 = vmatprep.subr.mxu0 0.0
    %v379 = vand.u32 %v33, 4294901760
    %380 = vmatpush1.msra.mxu0 %v379
    %381 = vmatprep.subr.mxu0 0.0
    %v382 = vand.u32 %v34, 4294901760
    %383 = vmatpush1.msra.mxu0 %v382
    %384 = vmatprep.subr.mxu0 0.0
    %v385 = vand.u32 %v35, 4294901760
    %386 = vmatpush1.msra.mxu0 %v385
    %387 = vmatprep.subr.mxu0 0.0
    %v388 = vand.u32 %v36, 4294901760
    %389 = vmatpush1.msra.mxu0 %v388
    %390 = vmatprep.subr.mxu0 0.0
    %v391 = vand.u32 %v37, 4294901760
    %392 = vmatpush1.msra.mxu0 %v391
    %393 = vmatprep.subr.mxu0 0.0
    %394 = vmatpush1.msra.mxu0 0.0
    %395 = vmatprep.subr.mxu0 0.0
    %396 = vmatpush1.msra.mxu0 0.0
    %397 = vmatprep.subr.mxu0 0.0
    %398 = vmatpush1.msra.mxu0 0.0
    %399 = vmatprep.subr.mxu0 0.0
    %400 = vmatpush1.msra.mxu0 0.0
    %401 = vmatprep.subr.mxu0 0.0
    %402 = vmatpush1.msra.mxu0 0.0
    %403 = vmatprep.subr.mxu0 0.0
    %404 = vmatpush1.msra.mxu0 0.0
    %405 = vmatprep.subr.mxu0 0.0
    %406 = vmatpush1.msra.mxu0 0.0
    %407 = vmatprep.subr.mxu0 0.0
    %408 = vmatpush1.msra.mxu0 0.0
    %409 = vmatprep.subr.mxu0 0.0
    %410 = vmatpush1.msra.mxu0 0.0
    %411 = vmatprep.subr.mxu0 0.0
    %412 = vmatpush1.msra.mxu0 0.0
    %413 = vmatprep.subr.mxu0 0.0
    %414 = vmatpush1.msra.mxu0 0.0
    %415 = vmatprep.subr.mxu0 0.0
    %416 = vmatpush1.msra.mxu0 0.0
    %417 = vmatprep.subr.mxu0 0.0
    %418 = vmatpush1.msra.mxu0 0.0
    %419 = vmatprep.subr.mxu0 0.0
    %420 = vmatpush1.msra.mxu0 0.0
    %421 = vmatprep.subr.mxu0 0.0
    %422 = vmatpush1.msra.mxu0 0.0
    %423 = vmatprep.subr.mxu0 0.0
    %424 = vmatpush1.msra.mxu0 0.0
    %425 = vmatprep.subr.mxu0 0.0
    %426 = vmatpush1.msra.mxu0 0.0
    %427 = vmatprep.subr.mxu0 0.0
    %428 = vmatpush1.msra.mxu0 0.0
    %429 = vmatprep.subr.mxu0 0.0
    %430 = vmatpush1.msra.mxu0 0.0
    %431 = vmatprep.subr.mxu0 0.0
    %432 = vmatpush1.msra.mxu0 0.0
    %433 = vmatprep.subr.mxu0 0.0
    %434 = vmatpush1.msra.mxu0 0.0
    %435 = vmatprep.subr.mxu0 0.0
    %436 = vmatpush1.msra.mxu0 0.0
    %437 = vmatprep.subr.mxu0 0.0
    %438 = vmatpush1.msra.mxu0 0.0
    %439 = vmatprep.subr.mxu0 0.0
    %440 = vmatpush1.msra.mxu0 0.0
    %441 = vmatprep.mubr.f32.mxu0 0.0
    %v442 = vand.u32 %v59, 4294901760
    %v443 = vsub.f32 %v59, %v442
    %v444 = vand.u32 %v443, 4294901760
    %445 = vmatmul.mubr.f32.gmra.mrb[0].mxu0 %v444
    %v446 = vpop.f32.mrb[0].mxu0
    %v447 = vadd.f32 %v359, %v446
    %v448 = vpop.f32.mrb[0].mxu0
    %449 = vmatprep.mubr.f32.mxu0 0.0
    %v450 = vand.u32 %v62, 4294901760
    %v451 = vsub.f32 %v62, %v450
    %v452 = vand.u32 %v451, 4294901760
    %453 = vmatmul.mubr.f32.gmra.mrb[0].mxu0 %v452
    %v454 = vpop.f32.mrb[0].mxu0
    %v455 = vadd.f32 %v366, %v454
    %v456 = vpop.f32.mrb[0].mxu0
    %457 = vdwg.mxu0
    %458 = vmatprep.subr.mxu0 0.0
    %v459 = vand.u32 %v30, 4294901760
    %v460 = vsub.f32 %v30, %v459
    %v461 = vand.u32 %v460, 4294901760
    %462 = vmatpush1.msra.mxu0 %v461
    %463 = vmatprep.subr.mxu0 0.0
    %v464 = vand.u32 %v31, 4294901760
    %v465 = vsub.f32 %v31, %v464
    %v466 = vand.u32 %v465, 4294901760
    %467 = vmatpush1.msra.mxu0 %v466
    %468 = vmatprep.subr.mxu0 0.0
    %v469 = vand.u32 %v32, 4294901760
    %v470 = vsub.f32 %v32, %v469
    %v471 = vand.u32 %v470, 4294901760
    %472 = vmatpush1.msra.mxu0 %v471
    %473 = vmatprep.subr.mxu0 0.0
    %v474 = vand.u32 %v33, 4294901760
    %v475 = vsub.f32 %v33, %v474
    %v476 = vand.u32 %v475, 4294901760
    %477 = vmatpush1.msra.mxu0 %v476
    %478 = vmatprep.subr.mxu0 0.0
    %v479 = vand.u32 %v34, 4294901760
    %v480 = vsub.f32 %v34, %v479
    %v481 = vand.u32 %v480, 4294901760
    %482 = vmatpush1.msra.mxu0 %v481
    %483 = vmatprep.subr.mxu0 0.0
    %v484 = vand.u32 %v35, 4294901760
    %v485 = vsub.f32 %v35, %v484
    %v486 = vand.u32 %v485, 4294901760
    %487 = vmatpush1.msra.mxu0 %v486
    %488 = vmatprep.subr.mxu0 0.0
    %v489 = vand.u32 %v36, 4294901760
    %v490 = vsub.f32 %v36, %v489
    %v491 = vand.u32 %v490, 4294901760
    %492 = vmatpush1.msra.mxu0 %v491
    %493 = vmatprep.subr.mxu0 0.0
    %v494 = vand.u32 %v37, 4294901760
    %v495 = vsub.f32 %v37, %v494
    %v496 = vand.u32 %v495, 4294901760
    %497 = vmatpush1.msra.mxu0 %v496
    %498 = vmatprep.subr.mxu0 0.0
    %499 = vmatpush1.msra.mxu0 0.0
    %500 = vmatprep.subr.mxu0 0.0
    %501 = vmatpush1.msra.mxu0 0.0
    %502 = vmatprep.subr.mxu0 0.0
    %503 = vmatpush1.msra.mxu0 0.0
    %504 = vmatprep.subr.mxu0 0.0
    %505 = vmatpush1.msra.mxu0 0.0
    %506 = vmatprep.subr.mxu0 0.0
    %507 = vmatpush1.msra.mxu0 0.0
    %508 = vmatprep.subr.mxu0 0.0
    %509 = vmatpush1.msra.mxu0 0.0
    %510 = vmatprep.subr.mxu0 0.0
    %511 = vmatpush1.msra.mxu0 0.0
    %512 = vmatprep.subr.mxu0 0.0
    %513 = vmatpush1.msra.mxu0 0.0
    %514 = vmatprep.subr.mxu0 0.0
    %515 = vmatpush1.msra.mxu0 0.0
    %516 = vmatprep.subr.mxu0 0.0
    %517 = vmatpush1.msra.mxu0 0.0
    %518 = vmatprep.subr.mxu0 0.0
    %519 = vmatpush1.msra.mxu0 0.0
    %520 = vmatprep.subr.mxu0 0.0
    %521 = vmatpush1.msra.mxu0 0.0
    %522 = vmatprep.subr.mxu0 0.0
    %523 = vmatpush1.msra.mxu0 0.0
    %524 = vmatprep.subr.mxu0 0.0
    %525 = vmatpush1.msra.mxu0 0.0
    %526 = vmatprep.subr.mxu0 0.0
    %527 = vmatpush1.msra.mxu0 0.0
    %528 = vmatprep.subr.mxu0 0.0
    %529 = vmatpush1.msra.mxu0 0.0
    %530 = vmatprep.subr.mxu0 0.0
    %531 = vmatpush1.msra.mxu0 0.0
    %532 = vmatprep.subr.mxu0 0.0
    %533 = vmatpush1.msra.mxu0 0.0
    %534 = vmatprep.subr.mxu0 0.0
    %535 = vmatpush1.msra.mxu0 0.0
    %536 = vmatprep.subr.mxu0 0.0
    %537 = vmatpush1.msra.mxu0 0.0
    %538 = vmatprep.subr.mxu0 0.0
    %539 = vmatpush1.msra.mxu0 0.0
    %540 = vmatprep.subr.mxu0 0.0
    %541 = vmatpush1.msra.mxu0 0.0
    %542 = vmatprep.subr.mxu0 0.0
    %543 = vmatpush1.msra.mxu0 0.0
    %544 = vmatprep.subr.mxu0 0.0
    %545 = vmatpush1.msra.mxu0 0.0
    %546 = vmatprep.mubr.f32.mxu0 0.0
    %v547 = vand.u32 %v59, 4294901760
    %548 = vmatmul.mubr.f32.gmra.mrb[0].mxu0 %v547
    %v549 = vpop.f32.mrb[0].mxu0
    %v550 = vadd.f32 %v447, %v549
    %v551 = vpop.f32.mrb[0].mxu0
    %552 = vmatprep.mubr.f32.mxu0 0.0
    %v553 = vand.u32 %v62, 4294901760
    %554 = vmatmul.mubr.f32.gmra.mrb[0].mxu0 %v553
    %v555 = vpop.f32.mrb[0].mxu0
    %v556 = vadd.f32 %v455, %v555
    %v557 = vpop.f32.mrb[0].mxu0
    %558 = vdwg.mxu0
    %559 = vmatprep.subr.mxu0 0.0
    %v560 = vand.u32 %v30, 4294901760
    %561 = vmatpush1.msra.mxu0 %v560
    %562 = vmatprep.subr.mxu0 0.0
    %v563 = vand.u32 %v31, 4294901760
    %564 = vmatpush1.msra.mxu0 %v563
    %565 = vmatprep.subr.mxu0 0.0
    %v566 = vand.u32 %v32, 4294901760
    %567 = vmatpush1.msra.mxu0 %v566
    %568 = vmatprep.subr.mxu0 0.0
    %v569 = vand.u32 %v33, 4294901760
    %570 = vmatpush1.msra.mxu0 %v569
    %571 = vmatprep.subr.mxu0 0.0
    %v572 = vand.u32 %v34, 4294901760
    %573 = vmatpush1.msra.mxu0 %v572
    %574 = vmatprep.subr.mxu0 0.0
    %v575 = vand.u32 %v35, 4294901760
    %576 = vmatpush1.msra.mxu0 %v575
    %577 = vmatprep.subr.mxu0 0.0
    %v578 = vand.u32 %v36, 4294901760
    %579 = vmatpush1.msra.mxu0 %v578
    %580 = vmatprep.subr.mxu0 0.0
    %v581 = vand.u32 %v37, 4294901760
    %582 = vmatpush1.msra.mxu0 %v581
    %583 = vmatprep.subr.mxu0 0.0
    %584 = vmatpush1.msra.mxu0 0.0
    %585 = vmatprep.subr.mxu0 0.0
    %586 = vmatpush1.msra.mxu0 0.0
    %587 = vmatprep.subr.mxu0 0.0
    %588 = vmatpush1.msra.mxu0 0.0
    %589 = vmatprep.subr.mxu0 0.0
    %590 = vmatpush1.msra.mxu0 0.0
    %591 = vmatprep.subr.mxu0 0.0
    %592 = vmatpush1.msra.mxu0 0.0
    %593 = vmatprep.subr.mxu0 0.0
    %594 = vmatpush1.msra.mxu0 0.0
    %595 = vmatprep.subr.mxu0 0.0
    %596 = vmatpush1.msra.mxu0 0.0
    %597 = vmatprep.subr.mxu0 0.0
    %598 = vmatpush1.msra.mxu0 0.0
    %599 = vmatprep.subr.mxu0 0.0
    %600 = vmatpush1.msra.mxu0 0.0
    %601 = vmatprep.subr.mxu0 0.0
    %602 = vmatpush1.msra.mxu0 0.0
    %603 = vmatprep.subr.mxu0 0.0
    %604 = vmatpush1.msra.mxu0 0.0
    %605 = vmatprep.subr.mxu0 0.0
    %606 = vmatpush1.msra.mxu0 0.0
    %607 = vmatprep.subr.mxu0 0.0
    %608 = vmatpush1.msra.mxu0 0.0
    %609 = vmatprep.subr.mxu0 0.0
    %610 = vmatpush1.msra.mxu0 0.0
    %611 = vmatprep.subr.mxu0 0.0
    %612 = vmatpush1.msra.mxu0 0.0
    %613 = vmatprep.subr.mxu0 0.0
    %614 = vmatpush1.msra.mxu0 0.0
    %615 = vmatprep.subr.mxu0 0.0
    %616 = vmatpush1.msra.mxu0 0.0
    %617 = vmatprep.subr.mxu0 0.0
    %618 = vmatpush1.msra.mxu0 0.0
    %619 = vmatprep.subr.mxu0 0.0
    %620 = vmatpush1.msra.mxu0 0.0
    %621 = vmatprep.subr.mxu0 0.0
    %622 = vmatpush1.msra.mxu0 0.0
    %623 = vmatprep.subr.mxu0 0.0
    %624 = vmatpush1.msra.mxu0 0.0
    %625 = vmatprep.subr.mxu0 0.0
    %626 = vmatpush1.msra.mxu0 0.0
    %627 = vmatprep.subr.mxu0 0.0
    %628 = vmatpush1.msra.mxu0 0.0
    %629 = vmatprep.subr.mxu0 0.0
    %630 = vmatpush1.msra.mxu0 0.0
    %631 = vmatprep.mubr.f32.mxu0 0.0
    %v632 = vand.u32 %v59, 4294901760
    %633 = vmatmul.mubr.f32.gmra.mrb[0].mxu0 %v632
    %v634 = vpop.f32.mrb[0].mxu0
    %v635 = vadd.f32 %v550, %v634
    %v636 = vpop.f32.mrb[0].mxu0
    %637 = vmatprep.mubr.f32.mxu0 0.0
    %v638 = vand.u32 %v62, 4294901760
    %639 = vmatmul.mubr.f32.gmra.mrb[0].mxu0 %v638
    %v640 = vpop.f32.mrb[0].mxu0
    %v641 = vadd.f32 %v556, %v640
    %v642 = vpop.f32.mrb[0].mxu0
    %643 = vdwg.mxu0
    %v644 = vadd.f32 %v55, %v635
    %v645 = vadd.f32 %v56, %v641
    %646 = vst [vmem:[#allocation2] sm:$0xff] %v644
    %647 = vst [vmem:[#allocation2 + $0x8] sm:$0xff] %v645
    %v648 = vld [vmem:[#allocation2] sm:$0xff]
    %v649 = vld [vmem:[#allocation2 + $0x8] sm:$0xff]
    %650 = vst [vmem:[#allocation6] sm:$0xff] %v648
    %651 = vst [vmem:[#allocation6 + $0x8] sm:$0xff] %v649
    // Predicated region
    $region14: #{tpu_custom_call.1} parent=1 // pred_check
      _
    $region15: #{tpu_custom_call.1} parent=1 // pred_check_branch
      %653 = sbr.rel (0) target = $region17
    $region16: #{tpu_custom_call.1} parent=1 // pred_region
      %s655 = ssub.s32 256, 256
      %656 = vsyncadd [#allocation5], %s655
      %s657 = sshll.u32 [#allocation6], 4
      %s658 = int_to_ptr.vmem [resolvable:$true] %s657
      %663 = dma.vmem_to_hbm [thread:$0]  %s658, 256, %s2, [#allocation5], 128, 128, 8
    $region17: #{tpu_custom_call.1} parent=1 // pred_fallthru
      _
    // Predicated region
    $region18: #{tpu_custom_call.1} parent=1 // pred_check
      _
    $region19: #{tpu_custom_call.1} parent=1 // pred_check_branch
      %665 = sbr.rel (0) target = $region21
    $region20: #{tpu_custom_call.1} parent=1 // pred_region
      %666 = dma.done [#allocation5], 256
    $region21: #{tpu_custom_call.1} parent=1 // pred_fallthru
      _
    %667 = vsyncpa [#allocation4], 1
    %668 = vsyncpa [#allocation5], 1

</llo_original>
